<compile_context>
chip_gen: v7x
topology: tpu7x:2x2x1
jax: 0.10.0
libtpu: 0.0.40
codegen_flags: <defaults>
</compile_context>

<pallas_src>
import jax
import jax.numpy as jnp
from jax.experimental import pallas as pl
from jax.experimental.pallas import tpu as pltpu


def _round_up(x, m):
    return (x + m - 1) // m * m


def rezero_linear_kernel(g_ref, x_ref, w_ref, b_ref, o_ref, acc_ref):
    """Computes one (tm, tn) output tile; K-reduction runs over grid axis 2."""
    k = pl.program_id(2)

    @pl.when(k == 0)
    def _():
        acc_ref[...] = jnp.zeros_like(acc_ref)

    # fn(x) = x @ W  (bf16 inputs, f32 accumulation on the MXU)
    acc_ref[...] += jnp.dot(
        x_ref[...], w_ref[...], preferred_element_type=jnp.float32
    )

    @pl.when(k == pl.num_programs(2) - 1)
    def _():
        # Epilogue in f32: bias add, then the ReZero scalar scale.
        y = acc_ref[...] + b_ref[...]              # (tm, tn) + (1, tn)
        o_ref[...] = (y * g_ref[0]).astype(o_ref.dtype)


def rezero_forward(x, w, b, g, *, tm=256, tn=256, tk=512):
    """ReZero(Linear) forward: (x @ W + b) * g.

    x: [B, S, D_in] float32, w: [D_in, D_out], b: [D_out], g: scalar.
    Returns [B, S, D_out] in x.dtype.
    """
    B, S, D_in = x.shape
    D_out = w.shape[1]
    M = B * S

    # Clamp tile sizes for small problems; keep sublane(8)/lane(128) alignment.
    tm = min(tm, _round_up(M, 8))
    tn = min(tn, _round_up(D_out, 128))
    tk = min(tk, _round_up(D_in, 128))

    M_pad = _round_up(M, tm)
    N_pad = _round_up(D_out, tn)
    K_pad = _round_up(D_in, tk)

    # bf16 MXU inputs; zero padding keeps the matmul result exact.
    x2 = jnp.pad(
        x.reshape(M, D_in).astype(jnp.bfloat16),
        ((0, M_pad - M), (0, K_pad - D_in)),
    )
    w2 = jnp.pad(
        w.astype(jnp.bfloat16),
        ((0, K_pad - D_in), (0, N_pad - D_out)),
    )
    b2 = jnp.pad(b.astype(jnp.float32), (0, N_pad - D_out)).reshape(1, N_pad)
    g1 = jnp.asarray(g, jnp.float32).reshape(1)     # scalar param in SMEM

    grid = (M_pad // tm, N_pad // tn, K_pad // tk)

    cost = pl.CostEstimate(
        flops=2 * M * D_in * D_out,
        transcendentals=0,
        bytes_accessed=(
            M * D_in * 2 + D_in * D_out * 2 + D_out * 4
            + M * D_out * x.dtype.itemsize
        ),
    )

    out = pl.pallas_call(
        rezero_linear_kernel,
        out_shape=jax.ShapeDtypeStruct((M_pad, N_pad), x.dtype),
        grid_spec=pltpu.PrefetchScalarGridSpec(
            num_scalar_prefetch=0,
            grid=grid,
            in_specs=[
                pl.BlockSpec(memory_space=pltpu.SMEM),            # g (scalar)
                pl.BlockSpec((tm, tk), lambda i, j, k: (i, k)),   # x tile
                pl.BlockSpec((tk, tn), lambda i, j, k: (k, j)),   # W tile
                pl.BlockSpec((1, tn), lambda i, j, k: (0, j)),    # bias tile
            ],
            out_specs=pl.BlockSpec((tm, tn), lambda i, j, k: (i, j)),
            scratch_shapes=[pltpu.VMEM((tm, tn), jnp.float32)],   # f32 acc
        ),
        compiler_params=pltpu.CompilerParams(
            dimension_semantics=("parallel", "parallel", "arbitrary"),
            vmem_limit_bytes=64 * 1024 * 1024,
        ),
        cost_estimate=cost,
    )(g1, x2, w2, b2)

    return out[:M, :D_out].reshape(B, S, D_out)


if __name__ == "__main__":
    key = jax.random.PRNGKey(0)
    kx, kw, kb = jax.random.split(key, 3)

    B, S, D = 2, 8, 32
    x = jax.random.normal(kx, (B, S, D), dtype=jnp.float32)

    # Deterministic "fn" parameters (Linear D->D) and the ReZero scalar g.
    w = jax.random.normal(kw, (D, D), dtype=jnp.float32) * (1.0 / jnp.sqrt(D))
    b = jax.random.normal(kb, (D,), dtype=jnp.float32) * 0.01
    g = jnp.float32(0.001)   # nn.Parameter(torch.tensor(0.001))

    out = rezero_forward(x, w, b, g)
    jax.block_until_ready(out)

    # Reference with the same bf16 input quantization the kernel uses
    # (f32 accumulation / epilogue) -> tight tolerance.
    x_q = x.reshape(B * S, D).astype(jnp.bfloat16).astype(jnp.float32)
    w_q = w.astype(jnp.bfloat16).astype(jnp.float32)
    ref_q = ((x_q @ w_q + b) * g).reshape(B, S, D)
    assert jnp.allclose(out, ref_q, atol=1e-5, rtol=1e-3), "mismatch vs bf16 ref"

    # Loose check against the pure-f32 PyTorch-equivalent math.
    ref_f32 = ((x.reshape(B * S, D) @ w + b) * g).reshape(B, S, D)
    assert jnp.allclose(out, ref_f32, atol=5e-4, rtol=5e-2), "mismatch vs f32 ref"

    print("KERNEL_OK")
</pallas_src>

<mosaic_0001>
module attributes {stable_mosaic.version = 11 : i64} {
  func.func @rezero_linear_kernel(%arg0: i32, %arg1: i32, %arg2: i32, %arg3: memref<1xf32, #tpu.memory_space<smem>>, %arg4: memref<16x128xbf16, #tpu.memory_space<vmem>>, %arg5: memref<128x128xbf16, #tpu.memory_space<vmem>>, %arg6: memref<1x128xf32, #tpu.memory_space<vmem>>, %arg7: memref<16x128xf32, #tpu.memory_space<vmem>>, %arg8: memref<16x128xf32, #tpu.memory_space<vmem>>) attributes {dimension_semantics = [#tpu.dimension_semantics<parallel>, #tpu.dimension_semantics<parallel>, #tpu.dimension_semantics<arbitrary>], iteration_bounds = array<i64: 1, 1, 1>, scalar_prefetch = 0 : i64, scratch_operands = 1 : i64, tpu.core_type = #tpu.core_type<tc>, window_params = [{transform_indices = @transform_0, window_bounds = array<i64: 1>}, {transform_indices = @transform_1, window_bounds = array<i64: 16, 128>}, {transform_indices = @transform_2, window_bounds = array<i64: 128, 128>}, {transform_indices = @transform_3, window_bounds = array<i64: 1, 128>}, {transform_indices = @transform_4, window_bounds = array<i64: 16, 128>}]} {
    %c0_i32 = arith.constant 0 : i32
    %0 = arith.cmpi eq, %arg2, %c0_i32 : i32
    %1 = arith.extui %0 : i1 to i32
    %c0_i32_0 = arith.constant 0 : i32
    %2 = arith.cmpi ne, %1, %c0_i32_0 : i32
    scf.if %2 {
      %cst_10 = arith.constant 0.000000e+00 : f32
      %12 = vector.broadcast %cst_10 : f32 to vector<16x128xf32>
      %c0_11 = arith.constant 0 : index
      %c0_12 = arith.constant 0 : index
      %13 = vector.load %arg8[%c0_11, %c0_12] : memref<16x128xf32, #tpu.memory_space<vmem>>, vector<16x128xf32>
      tpu.vector_store %arg8[%c0_11, %c0_12], %12 {strides = array<i32>} : memref<16x128xf32, #tpu.memory_space<vmem>>, vector<16x128xf32>,
    } else {
    }
    %c0 = arith.constant 0 : index
    %c0_1 = arith.constant 0 : index
    %3 = vector.load %arg8[%c0, %c0_1] : memref<16x128xf32, #tpu.memory_space<vmem>>, vector<16x128xf32>
    %c0_2 = arith.constant 0 : index
    %c0_3 = arith.constant 0 : index
    %4 = vector.load %arg4[%c0_2, %c0_3] : memref<16x128xbf16, #tpu.memory_space<vmem>>, vector<16x128xbf16>
    %c0_4 = arith.constant 0 : index
    %c0_5 = arith.constant 0 : index
    %5 = vector.load %arg5[%c0_4, %c0_5] : memref<128x128xbf16, #tpu.memory_space<vmem>>, vector<128x128xbf16>
    %cst = arith.constant dense<0.000000e+00> : vector<16x128xf32>
    %6 = tpu.matmul %4, %5, %cst {dimension_numbers = #tpu.dot_dimension_numbers<[1], [0], [0], [1], [0, 0, 1, 1], [], []>} : vector<16x128xbf16>, vector<128x128xbf16>, vector<16x128xf32> -> vector<16x128xf32>
    %7 = arith.addf %3, %6 : vector<16x128xf32>
    %c0_6 = arith.constant 0 : index
    %c0_7 = arith.constant 0 : index
    %8 = vector.load %arg8[%c0_6, %c0_7] : memref<16x128xf32, #tpu.memory_space<vmem>>, vector<16x128xf32>
    tpu.vector_store %arg8[%c0_6, %c0_7], %7 {strides = array<i32>} : memref<16x128xf32, #tpu.memory_space<vmem>>, vector<16x128xf32>,
    %c0_i32_8 = arith.constant 0 : i32
    %9 = arith.cmpi eq, %arg2, %c0_i32_8 : i32
    %10 = arith.extui %9 : i1 to i32
    %c0_i32_9 = arith.constant 0 : i32
    %11 = arith.cmpi ne, %10, %c0_i32_9 : i32
    scf.if %11 {
      %c0_10 = arith.constant 0 : index
      %c0_11 = arith.constant 0 : index
      %12 = vector.load %arg8[%c0_10, %c0_11] : memref<16x128xf32, #tpu.memory_space<vmem>>, vector<16x128xf32>
      %c0_12 = arith.constant 0 : index
      %c0_13 = arith.constant 0 : index
      %13 = vector.load %arg6[%c0_12, %c0_13] : memref<1x128xf32, #tpu.memory_space<vmem>>, vector<1x128xf32>
      %14 = vector.broadcast %13 : vector<1x128xf32> to vector<16x128xf32>
      %15 = arith.addf %12, %14 : vector<16x128xf32>
      %c0_14 = arith.constant 0 : index
      %16 = memref.load %arg3[%c0_14] : memref<1xf32, #tpu.memory_space<smem>>
      %17 = vector.broadcast %16 : f32 to vector<16x128xf32>
      %18 = arith.mulf %15, %17 : vector<16x128xf32>
      %c0_15 = arith.constant 0 : index
      %c0_16 = arith.constant 0 : index
      %19 = vector.load %arg7[%c0_15, %c0_16] : memref<16x128xf32, #tpu.memory_space<vmem>>, vector<16x128xf32>
      tpu.vector_store %arg7[%c0_15, %c0_16], %18 {strides = array<i32>} : memref<16x128xf32, #tpu.memory_space<vmem>>, vector<16x128xf32>,
    } else {
    }
    return
  }
  func.func @transform_0(%arg0: i32, %arg1: i32, %arg2: i32) -> i32 {
    %c0_i32 = arith.constant 0 : i32
    %c0_i32_0 = arith.constant 0 : i32
    return %c0_i32 : i32
  }
  func.func @transform_1(%arg0: i32, %arg1: i32, %arg2: i32) -> (i32, i32) {
    %c0_i32 = arith.constant 0 : i32
    return %arg0, %arg2 : i32, i32
  }
  func.func @transform_2(%arg0: i32, %arg1: i32, %arg2: i32) -> (i32, i32) {
    %c0_i32 = arith.constant 0 : i32
    return %arg2, %arg1 : i32, i32
  }
  func.func @transform_3(%arg0: i32, %arg1: i32, %arg2: i32) -> (i32, i32) {
    %c0_i32 = arith.constant 0 : i32
    %c0_i32_0 = arith.constant 0 : i32
    return %c0_i32, %arg1 : i32, i32
  }
  func.func @transform_4(%arg0: i32, %arg1: i32, %arg2: i32) -> (i32, i32) {
    %c0_i32 = arith.constant 0 : i32
    return %arg0, %arg1 : i32, i32
  }
}

</mosaic_0001>

<llo_original>
// kernel: tpu_custom_call.1
$region0: #{tpu_custom_call.1}
  #allocation0 [shape = 'u32[]', space=smem, size = 0x4, offset = 0x4, fixed_abs, tag = 'smem constant byte address 0x4 - core index']
  #allocation1 [shape = 'u32[144,128]{1,0:T(1,128)}', space=vmem, size = 0x12000, scoped, tag = 'internal scratch']
  #allocation2 [shape = 'f32[16,128]{1,0:T(8,128)}', space=vmem, size = 0x2000, scoped, tag = 'scratch operand']
  #allocation3 [shape = 'f32[1]{0:T(128)S(6)}', space=smem, size = 0x200, scoped, tag = 'scoped memory for tpu_custom_call.1']
  %s0 = inlined_call_operand.<no memory space> [shape: f32[1], index: 0, kind: input, shape index: {}]
  %s1 = inlined_call_operand.hbm [shape: bf16[16,128], index: 1, kind: input, shape index: {}]
  %s2 = inlined_call_operand.hbm [shape: bf16[128,128], index: 2, kind: input, shape index: {}]
  %s3 = inlined_call_operand.hbm [shape: f32[1,128], index: 3, kind: input, shape index: {}]
  %s4 = inlined_call_operand.hbm [shape: f32[16,128], index: 4, kind: output, shape index: {}]
  %s5 = sld [smem:[#allocation0]]
  $region46: #{tpu_custom_call.1} parent=0
    _
  %s7 = ssub.s32 1, %s5
  %s8 = scalar_select 0, %s7, %s5
  %9 = sst [smem:[#allocation3]] %s0
  $region1: #{tpu_custom_call.1} parent=0
    #allocation4 [shape = 'u8[4096]{0}', space=vmem, size = 0x1000, scoped, tag = 'input window, operand 1, single buffered']
    #allocation5 [shape = 's32[1]{0}', space=sflag, size = 0x4, scoped, tag = 'scoped memory for tpu_custom_call.1']
    #allocation6 [shape = 's32[1]{0}', space=sflag, size = 0x4, scoped, tag = 'scoped memory for tpu_custom_call.1']
    #allocation7 [shape = 'u8[32768]{0}', space=vmem, size = 0x8000, scoped, tag = 'input window, operand 2, single buffered']
    #allocation8 [shape = 's32[1]{0}', space=sflag, size = 0x4, scoped, tag = 'scoped memory for tpu_custom_call.1']
    #allocation9 [shape = 'u8[512]{0}', space=vmem, size = 0x400, scoped, tag = 'input window, operand 3, single buffered']
    #allocation10 [shape = 'u8[8192]{0}', space=vmem, size = 0x2000, scoped, tag = 'output window, operand 0, single buffered']
    %10 = vsyncpa [#allocation5], 0
    %11 = vsyncpa [#allocation8], 0
    %12 = vsyncpa [#allocation6], 0
    // Predicated region
    $region2: #{tpu_custom_call.1} parent=1 // pred_check
      _
    $region3: #{tpu_custom_call.1} parent=1 // pred_check_branch
      %14 = sbr.rel (0) target = $region5
    $region4: #{tpu_custom_call.1} parent=1 // pred_region
      _
    $region5: #{tpu_custom_call.1} parent=1 // pred_fallthru
      _
    // Predicated region
    $region6: #{tpu_custom_call.1} parent=1 // pred_check
      _
    $region7: #{tpu_custom_call.1} parent=1 // pred_check_branch
      %16 = sbr.rel (0) target = $region9
    $region8: #{tpu_custom_call.1} parent=1 // pred_region
      %s18 = ssub.s32 128, 128
      %19 = vsyncadd [#allocation5], %s18
      %s20 = sshll.u32 [#allocation4], 4
      %s21 = int_to_ptr.vmem [resolvable:$true] %s20
      %26 = dma.hbm_to_vmem [thread:$0]  %s1, 128, %s21, [#allocation5], 64, 64, 4
    $region9: #{tpu_custom_call.1} parent=1 // pred_fallthru
      _
    // Predicated region
    $region10: #{tpu_custom_call.1} parent=1 // pred_check
      _
    $region11: #{tpu_custom_call.1} parent=1 // pred_check_branch
      %28 = sbr.rel (0) target = $region13
    $region12: #{tpu_custom_call.1} parent=1 // pred_region
      %s30 = ssub.s32 1024, 1024
      %31 = vsyncadd [#allocation8], %s30
      %s32 = sshll.u32 [#allocation7], 4
      %s33 = int_to_ptr.vmem [resolvable:$true] %s32
      %38 = dma.hbm_to_vmem [thread:$0]  %s2, 1024, %s33, [#allocation8], 64, 64, 4
    $region13: #{tpu_custom_call.1} parent=1 // pred_fallthru
      _
    // Predicated region
    $region14: #{tpu_custom_call.1} parent=1 // pred_check
      _
    $region15: #{tpu_custom_call.1} parent=1 // pred_check_branch
      %40 = sbr.rel (0) target = $region17
    $region16: #{tpu_custom_call.1} parent=1 // pred_region
      %s42 = ssub.s32 16, 16
      %43 = vsyncadd [#allocation8], %s42
      %s45 = sshll.u32 [#allocation9], 4
      %s46 = int_to_ptr.vmem [resolvable:$true] %s45
      %48 = dma.hbm_to_vmem [thread:$0]  %s3, 16, %s46, [#allocation8]
    $region17: #{tpu_custom_call.1} parent=1 // pred_fallthru
      _
    // Predicated region
    $region18: #{tpu_custom_call.1} parent=1 // pred_check
      _
    $region19: #{tpu_custom_call.1} parent=1 // pred_check_branch
      %50 = sbr.rel (0) target = $region21
    $region20: #{tpu_custom_call.1} parent=1 // pred_region
      %51 = dma.done [#allocation5], 128
    $region21: #{tpu_custom_call.1} parent=1 // pred_fallthru
      _
    // Predicated region
    $region22: #{tpu_custom_call.1} parent=1 // pred_check
      _
    $region23: #{tpu_custom_call.1} parent=1 // pred_check_branch
      %53 = sbr.rel (0) target = $region25
    $region24: #{tpu_custom_call.1} parent=1 // pred_region
      %54 = dma.done [#allocation8], 1024
    $region25: #{tpu_custom_call.1} parent=1 // pred_fallthru
      _
    // Predicated region
    $region26: #{tpu_custom_call.1} parent=1 // pred_check
      _
    $region27: #{tpu_custom_call.1} parent=1 // pred_check_branch
      %56 = sbr.rel (0) target = $region29
    $region28: #{tpu_custom_call.1} parent=1 // pred_region
      %57 = dma.done [#allocation8], 16
    $region29: #{tpu_custom_call.1} parent=1 // pred_fallthru
      _
    %p59 = scmp.eq.s32.totalorder 0, 0
    // Predicated region
    $region30: #{tpu_custom_call.1} parent=1 // pred_check
      %p60 = pneg %p59
    $region31: #{tpu_custom_call.1} parent=1 // pred_check_branch
      %62 = sbr.rel (%p60) target = $region33
    $region32: #{tpu_custom_call.1} parent=1 // pred_region
      %63 = vst [vmem:[#allocation2] sm:$0xff] 0.0
      %64 = vst [vmem:[#allocation2 + $0x8] sm:$0xff] 0.0
    $region33: #{tpu_custom_call.1} parent=1 // pred_fallthru
      _
    %v65 = vld [vmem:[#allocation2] sm:$0xff]
    %v66 = vld [vmem:[#allocation2 + $0x8] sm:$0xff]
    %v67 = vld [vmem:[#allocation4] sm:$0xf]
    %v68 = vld [vmem:[#allocation4 + $0x4] sm:$0xf]
    %v69 = vld [vmem:[#allocation7] sm:$0xf]
    %v70 = vld [vmem:[#allocation7 + $0x4] sm:$0xf]
    %v71 = vld [vmem:[#allocation7 + $0x8] sm:$0xf]
    %v72 = vld [vmem:[#allocation7 + $0xc] sm:$0xf]
    %v73 = vld [vmem:[#allocation7 + $0x10] sm:$0xf]
    %v74 = vld [vmem:[#allocation7 + $0x14] sm:$0xf]
    %v75 = vld [vmem:[#allocation7 + $0x18] sm:$0xf]
    %v76 = vld [vmem:[#allocation7 + $0x1c] sm:$0xf]
    %v77 = vld [vmem:[#allocation7 + $0x20] sm:$0xf]
    %v78 = vld [vmem:[#allocation7 + $0x24] sm:$0xf]
    %v79 = vld [vmem:[#allocation7 + $0x28] sm:$0xf]
    %v80 = vld [vmem:[#allocation7 + $0x2c] sm:$0xf]
    %v81 = vld [vmem:[#allocation7 + $0x30] sm:$0xf]
    %v82 = vld [vmem:[#allocation7 + $0x34] sm:$0xf]
    %v83 = vld [vmem:[#allocation7 + $0x38] sm:$0xf]
    %v84 = vld [vmem:[#allocation7 + $0x3c] sm:$0xf]
    %v87 = vunpack.c.l.b16 %v67
    %v88 = vunpack.c.l.b16 %v68
    %v89 = vpack.c.b16 %v88, %v87
    %v107 = vunpack.c.l.b16 %v69
    %v108 = vunpack.c.l.b16 %v70
    %v109 = vunpack.c.l.b16 %v71
    %v110 = vunpack.c.l.b16 %v72
    %v111 = vunpack.c.l.b16 %v73
    %v112 = vunpack.c.l.b16 %v74
    %v113 = vunpack.c.l.b16 %v75
    %v114 = vunpack.c.l.b16 %v76
    %v115 = vunpack.c.l.b16 %v77
    %v116 = vunpack.c.l.b16 %v78
    %v117 = vunpack.c.l.b16 %v79
    %v118 = vunpack.c.l.b16 %v80
    %v119 = vunpack.c.l.b16 %v81
    %v120 = vunpack.c.l.b16 %v82
    %v121 = vunpack.c.l.b16 %v83
    %v122 = vunpack.c.l.b16 %v84
    %v123 = vpack.c.b16 %v108, %v107
    %v124 = vpack.c.b16 %v110, %v109
    %v125 = vpack.c.b16 %v112, %v111
    %v126 = vpack.c.b16 %v114, %v113
    %v127 = vpack.c.b16 %v116, %v115
    %v128 = vpack.c.b16 %v118, %v117
    %v129 = vpack.c.b16 %v120, %v119
    %v130 = vpack.c.b16 %v122, %v121
    %139 = vmatprep.subr.bf16.mxu0 0
    %140 = vmatpush1.bf16.msra.mxu0 %v123
    %141 = vmatprep.subr.bf16.mxu0 0
    %142 = vmatpush1.bf16.msra.mxu0 %v124
    %143 = vmatprep.subr.bf16.mxu0 0
    %144 = vmatpush1.bf16.msra.mxu0 %v125
    %145 = vmatprep.subr.bf16.mxu0 0
    %146 = vmatpush1.bf16.msra.mxu0 %v126
    %147 = vmatprep.subr.bf16.mxu0 0
    %148 = vmatpush1.bf16.msra.mxu0 %v127
    %149 = vmatprep.subr.bf16.mxu0 0
    %150 = vmatpush1.bf16.msra.mxu0 %v128
    %151 = vmatprep.subr.bf16.mxu0 0
    %152 = vmatpush1.bf16.msra.mxu0 %v129
    %153 = vmatprep.subr.bf16.mxu0 0
    %154 = vmatpush1.bf16.msra.mxu0 %v130
    %155 = vmatprep.subr.bf16.mxu0 0
    %156 = vmatpush1.bf16.msra.mxu0 0
    %157 = vmatprep.subr.bf16.mxu0 0
    %158 = vmatpush1.bf16.msra.mxu0 0
    %159 = vmatprep.subr.bf16.mxu0 0
    %160 = vmatpush1.bf16.msra.mxu0 0
    %161 = vmatprep.subr.bf16.mxu0 0
    %162 = vmatpush1.bf16.msra.mxu0 0
    %163 = vmatprep.subr.bf16.mxu0 0
    %164 = vmatpush1.bf16.msra.mxu0 0
    %165 = vmatprep.subr.bf16.mxu0 0
    %166 = vmatpush1.bf16.msra.mxu0 0
    %167 = vmatprep.subr.bf16.mxu0 0
    %168 = vmatpush1.bf16.msra.mxu0 0
    %169 = vmatprep.subr.bf16.mxu0 0
    %170 = vmatpush1.bf16.msra.mxu0 0
    %171 = vmatprep.mubr.bf16.mxu0 0
    %172 = vmatmul.mubr.bf16.gmra.mrb[0].mxu0 %v89
    %v173 = vpop.f32.mrb[0].mxu0
    %v174 = vadd.f32 0.0, %v173
    %v175 = vpop.f32.mrb[0].mxu0
    %v176 = vpop.f32.mrb[0].mxu0
    %v177 = vadd.f32 0.0, %v176
    %v178 = vpop.f32.mrb[0].mxu0
    %179 = vdwg.mxu0
    %v180 = vadd.f32 %v65, %v174
    %v181 = vadd.f32 %v66, %v177
    %182 = vst [vmem:[#allocation2] sm:$0xff] %v180
    %183 = vst [vmem:[#allocation2 + $0x8] sm:$0xff] %v181
    // Predicated region
    $region34: #{tpu_custom_call.1} parent=1 // pred_check
      %p184 = pneg %p59
    $region35: #{tpu_custom_call.1} parent=1 // pred_check_branch
      %186 = sbr.rel (%p184) target = $region37
    $region36: #{tpu_custom_call.1} parent=1 // pred_region
      %v187 = vld [vmem:[#allocation2] sm:$0xff]
      %v188 = vld [vmem:[#allocation2 + $0x8] sm:$0xff]
      %v189 = vld [vmem:[#allocation9] sm:$0x1]
      %v191 = vlaneseq
      %v192 = vshrl.u32 %v191, 7
      %v193 = vsub.s32 0, %v192
      %v194 = vrot.slane %v189, %v193
      %v196 = vadd.f32 %v187, %v194
      %v197 = vadd.f32 %v188, %v194
      %s198 = sld [smem:[#allocation3]]
      %v199 = vstv %s198
      %v200 = vmul.f32 %v196, %v199
      %v201 = vmul.f32 %v197, %v199
      %202 = vst [vmem:[#allocation10] sm:$0xff] %v200
      %203 = vst [vmem:[#allocation10 + $0x8] sm:$0xff] %v201
    $region37: #{tpu_custom_call.1} parent=1 // pred_fallthru
      _
    // Predicated region
    $region38: #{tpu_custom_call.1} parent=1 // pred_check
      _
    $region39: #{tpu_custom_call.1} parent=1 // pred_check_branch
      %205 = sbr.rel (0) target = $region41
    $region40: #{tpu_custom_call.1} parent=1 // pred_region
      %s207 = ssub.s32 256, 256
      %208 = vsyncadd [#allocation6], %s207
      %s209 = sshll.u32 [#allocation10], 4
      %s210 = int_to_ptr.vmem [resolvable:$true] %s209
      %215 = dma.vmem_to_hbm [thread:$0]  %s210, 256, %s4, [#allocation6], 128, 128, 8
    $region41: #{tpu_custom_call.1} parent=1 // pred_fallthru
      _
    // Predicated region
    $region42: #{tpu_custom_call.1} parent=1 // pred_check
      _
    $region43: #{tpu_custom_call.1} parent=1 // pred_check_branch
      %217 = sbr.rel (0) target = $region45
    $region44: #{tpu_custom_call.1} parent=1 // pred_region
      %218 = dma.done [#allocation6], 256
    $region45: #{tpu_custom_call.1} parent=1 // pred_fallthru
      _
    %219 = vsyncpa [#allocation5], 1
    %220 = vsyncpa [#allocation8], 1
    %221 = vsyncpa [#allocation6], 1

</llo_original>
